<compile_context>
chip_gen: v5e
topology: v5e:2x2
jax: 0.10.0
libtpu: 0.0.40
codegen_flags: <defaults>
</compile_context>

<pallas_src>
import functools

import jax
import jax.numpy as jnp
from jax.experimental import pallas as pl
from jax.experimental.pallas import tpu as pltpu

DIM_A = 2
DROPOUT_RATE = 0.8
OUT_PAD = 128  # lane-dense padded output width (>= DIM_A)
# keep iff bits < (1 - p) * 2^32
_KEEP_THRESHOLD = int(round((1.0 - DROPOUT_RATE) * 2.0**32))
_KEEP_SCALE = 1.0 / (1.0 - DROPOUT_RATE)


def _forward_body(x_ref, w1_ref, b1_ref, w2_ref, b2_ref, o_ref, bits_ref):
    # Hidden layer: tanh(x @ W1 + b1).  bf16 operands -> MXU, f32 accumulate.
    h = jnp.dot(x_ref[...], w1_ref[...], preferred_element_type=jnp.float32)
    h = jnp.tanh(h + b1_ref[...])

    if bits_ref is not None:
        # Dropout(p=0.8), inverted scaling: one compare + one select + one mul.
        keep = bits_ref[...] < jnp.uint32(_KEEP_THRESHOLD)
        h = jnp.where(keep, h * jnp.float32(_KEEP_SCALE), jnp.float32(0.0))

    # Output layer into a lane-dense (TB, 128) tile (W2/b2 are zero padded).
    o_ref[...] = (
        jnp.dot(h, w2_ref[...], preferred_element_type=jnp.float32) + b2_ref[...]
    ).astype(o_ref.dtype)


def _kernel_train(x_ref, bits_ref, w1_ref, b1_ref, w2_ref, b2_ref, o_ref):
    _forward_body(x_ref, w1_ref, b1_ref, w2_ref, b2_ref, o_ref, bits_ref)


def _kernel_eval(x_ref, w1_ref, b1_ref, w2_ref, b2_ref, o_ref):
    _forward_body(x_ref, w1_ref, b1_ref, w2_ref, b2_ref, o_ref, None)


def append_module_forward(params, x, *, key=None, training=True, block_batch=512):
    """Pallas wrapper.

    params = (w1 (H,H) stored (in,out), b1 (1,H), w2 (H,2) stored (in,out), b2 (1,2)).
    """
    w1, b1, w2, b2 = params
    batch, dim_h = x.shape

    # --- parameter prep (done once per call; cheap relative to the matmuls) ---
    w1_bf = w1.astype(jnp.bfloat16)                     # bf16 MXU operand
    x_bf = x.astype(jnp.bfloat16)                       # halves x DMA bytes
    b1_f32 = b1.astype(jnp.float32)
    w2_pad = jnp.zeros((dim_h, OUT_PAD), jnp.float32).at[:, :DIM_A].set(
        w2.astype(jnp.float32))
    b2_pad = jnp.zeros((1, OUT_PAD), jnp.float32).at[:, :DIM_A].set(
        b2.astype(jnp.float32))

    # --- batch tiling ---
    tb = min(block_batch, batch)
    num_blocks = pl.cdiv(batch, tb)
    padded_batch = num_blocks * tb
    if padded_batch != batch:
        x_bf = jnp.pad(x_bf, ((0, padded_batch - batch), (0, 0)))

    in_specs = [pl.BlockSpec((tb, dim_h), lambda i: (i, 0))]        # x tile
    inputs = [x_bf]
    if training:
        if key is None:
            key = jax.random.PRNGKey(0)
        # Independent random bits for every row/tile (no correlated masks).
        bits = jax.random.bits(key, (padded_batch, dim_h), dtype=jnp.uint32)
        in_specs.append(pl.BlockSpec((tb, dim_h), lambda i: (i, 0)))  # bits tile
        inputs.append(bits)
        kernel = _kernel_train
    else:
        kernel = _kernel_eval

    # Weights: constant index_map -> resident in VMEM across grid iterations.
    in_specs += [
        pl.BlockSpec((dim_h, dim_h), lambda i: (0, 0)),   # w1 (bf16)
        pl.BlockSpec((1, dim_h), lambda i: (0, 0)),       # b1
        pl.BlockSpec((dim_h, OUT_PAD), lambda i: (0, 0)),  # w2 padded
        pl.BlockSpec((1, OUT_PAD), lambda i: (0, 0)),     # b2 padded
    ]
    inputs += [w1_bf, b1_f32, w2_pad, b2_pad]

    out_spec = pl.BlockSpec((tb, OUT_PAD), lambda i: (i, 0))

    # --- explicit VMEM budget (double-buffered tiles + resident weights) ---
    # TODO(synk): for very large dim_h (bf16 W1 approaching v7x's 64 MiB VMEM),
    # add a K grid axis over dim_h with an f32 accumulator scratch (P3 pattern).
    vmem_bytes = (
        2 * tb * dim_h * 2                              # x tiles (bf16)
        + (2 * tb * dim_h * 4 if training else 0)       # bits tiles (u32)
        + 2 * tb * OUT_PAD * 4                          # output tiles (f32)
        + 2 * (dim_h * dim_h * 2                        # w1 (bf16)
               + dim_h * 4                              # b1
               + dim_h * OUT_PAD * 4                    # w2 padded
               + OUT_PAD * 4)                           # b2 padded
    )
    vmem_limit = int(min(vmem_bytes + (8 << 20), 100 << 20))

    flops = 2 * padded_batch * dim_h * dim_h + 2 * padded_batch * dim_h * OUT_PAD
    bytes_accessed = (
        padded_batch * dim_h * 2
        + (padded_batch * dim_h * 4 if training else 0)
        + dim_h * dim_h * 2 + dim_h * 4 + dim_h * OUT_PAD * 4 + OUT_PAD * 4
        + padded_batch * OUT_PAD * 4
    )

    out_pad = pl.pallas_call(
        kernel,
        out_shape=jax.ShapeDtypeStruct((padded_batch, OUT_PAD), jnp.float32),
        grid=(num_blocks,),
        in_specs=in_specs,
        out_specs=out_spec,
        compiler_params=pltpu.CompilerParams(
            dimension_semantics=("parallel",),   # shard batch tiles across TCs (v7x)
            vmem_limit_bytes=vmem_limit,
        ),
        cost_estimate=pl.CostEstimate(
            flops=flops,
            transcendentals=padded_batch * dim_h,   # tanh
            bytes_accessed=bytes_accessed,
        ),
    )(*inputs)

    return out_pad[:batch, :DIM_A]


def init_params(key, dim_h):
    """Deterministic init mirroring the PyTorch module:
    weights ~ N(0, 0.02), biases ~ N(0, 1)."""
    k1, k2, k3, k4 = jax.random.split(key, 4)
    w1 = 0.02 * jax.random.normal(k1, (dim_h, dim_h), jnp.float32)   # (in, out)
    b1 = jax.random.normal(k2, (1, dim_h), jnp.float32)
    w2 = 0.02 * jax.random.normal(k3, (dim_h, DIM_A), jnp.float32)   # (in, out)
    b2 = jax.random.normal(k4, (1, DIM_A), jnp.float32)
    return w1, b1, w2, b2


if __name__ == "__main__":
    key = jax.random.PRNGKey(0)
    k_params, k_x, k_drop = jax.random.split(key, 3)

    batch, dim_h = 8, 32
    params = init_params(k_params, dim_h)
    x = jax.random.normal(k_x, (batch, dim_h), jnp.float32)

    # Eval mode (dropout = identity): check against a pure-JAX f32 reference.
    out_eval = append_module_forward(params, x, training=False)
    jax.block_until_ready(out_eval)
    w1, b1, w2, b2 = params
    ref = jnp.tanh(x @ w1 + b1) @ w2 + b2
    assert out_eval.shape == (batch, DIM_A)
    # bf16 operands on the first matmul -> loosened tolerance vs f32 reference.
    assert jnp.allclose(out_eval, ref, atol=1e-2, rtol=1e-2), (
        float(jnp.max(jnp.abs(out_eval - ref))))

    # Train mode (stochastic dropout, p=0.8, inverted scaling).
    out_train = append_module_forward(params, x, key=k_drop, training=True)
    jax.block_until_ready(out_train)
    assert out_train.shape == (batch, DIM_A)
    assert bool(jnp.all(jnp.isfinite(out_train)))

    print("KERNEL_OK")
</pallas_src>

<mosaic_0001>
module attributes {stable_mosaic.version = 11 : i64} {
  func.func @_kernel_eval(%arg0: i32, %arg1: memref<8x32xbf16, #tpu.memory_space<vmem>>, %arg2: memref<32x32xbf16, #tpu.memory_space<vmem>>, %arg3: memref<1x32xf32, #tpu.memory_space<vmem>>, %arg4: memref<32x128xf32, #tpu.memory_space<vmem>>, %arg5: memref<1x128xf32, #tpu.memory_space<vmem>>, %arg6: memref<8x128xf32, #tpu.memory_space<vmem>>) attributes {dimension_semantics = [#tpu.dimension_semantics<parallel>], iteration_bounds = array<i64: 1>, scalar_prefetch = 0 : i64, scratch_operands = 0 : i64, tpu.core_type = #tpu.core_type<tc>, window_params = [{transform_indices = @transform_0, window_bounds = array<i64: 8, 32>}, {pipeline_mode = #tpu.pipeline_mode<synchronous>, transform_indices = @transform_1, window_bounds = array<i64: 32, 32>}, {pipeline_mode = #tpu.pipeline_mode<synchronous>, transform_indices = @transform_2, window_bounds = array<i64: 1, 32>}, {pipeline_mode = #tpu.pipeline_mode<synchronous>, transform_indices = @transform_3, window_bounds = array<i64: 32, 128>}, {pipeline_mode = #tpu.pipeline_mode<synchronous>, transform_indices = @transform_4, window_bounds = array<i64: 1, 128>}, {transform_indices = @transform_5, window_bounds = array<i64: 8, 128>}]} {
    %c0 = arith.constant 0 : index
    %c0_0 = arith.constant 0 : index
    %0 = vector.load %arg1[%c0, %c0_0] : memref<8x32xbf16, #tpu.memory_space<vmem>>, vector<8x32xbf16>
    %c0_1 = arith.constant 0 : index
    %c0_2 = arith.constant 0 : index
    %1 = vector.load %arg2[%c0_1, %c0_2] : memref<32x32xbf16, #tpu.memory_space<vmem>>, vector<32x32xbf16>
    %cst = arith.constant dense<0.000000e+00> : vector<8x32xf32>
    %2 = tpu.matmul %0, %1, %cst {dimension_numbers = #tpu.dot_dimension_numbers<[1], [0], [0], [1], [0, 0, 1, 1], [], []>} : vector<8x32xbf16>, vector<32x32xbf16>, vector<8x32xf32> -> vector<8x32xf32>
    %c0_3 = arith.constant 0 : index
    %c0_4 = arith.constant 0 : index
    %3 = vector.load %arg3[%c0_3, %c0_4] : memref<1x32xf32, #tpu.memory_space<vmem>>, vector<1x32xf32>
    %4 = vector.broadcast %3 : vector<1x32xf32> to vector<8x32xf32>
    %5 = arith.addf %2, %4 : vector<8x32xf32>
    %6 = math.tanh %5 : vector<8x32xf32>
    %c0_5 = arith.constant 0 : index
    %c0_6 = arith.constant 0 : index
    %7 = vector.load %arg4[%c0_5, %c0_6] : memref<32x128xf32, #tpu.memory_space<vmem>>, vector<32x128xf32>
    %cst_7 = arith.constant dense<0.000000e+00> : vector<8x128xf32>
    %8 = tpu.matmul %6, %7, %cst_7 {dimension_numbers = #tpu.dot_dimension_numbers<[1], [0], [0], [1], [0, 0, 1, 1], [], []>} : vector<8x32xf32>, vector<32x128xf32>, vector<8x128xf32> -> vector<8x128xf32>
    %c0_8 = arith.constant 0 : index
    %c0_9 = arith.constant 0 : index
    %9 = vector.load %arg5[%c0_8, %c0_9] : memref<1x128xf32, #tpu.memory_space<vmem>>, vector<1x128xf32>
    %10 = vector.broadcast %9 : vector<1x128xf32> to vector<8x128xf32>
    %11 = arith.addf %8, %10 : vector<8x128xf32>
    %c0_10 = arith.constant 0 : index
    %c0_11 = arith.constant 0 : index
    %12 = vector.load %arg6[%c0_10, %c0_11] : memref<8x128xf32, #tpu.memory_space<vmem>>, vector<8x128xf32>
    tpu.vector_store %arg6[%c0_10, %c0_11], %11 {strides = array<i32>} : memref<8x128xf32, #tpu.memory_space<vmem>>, vector<8x128xf32>,
    return
  }
  func.func @transform_0(%arg0: i32) -> (i32, i32) {
    %c0_i32 = arith.constant 0 : i32
    %c0_i32_0 = arith.constant 0 : i32
    return %arg0, %c0_i32 : i32, i32
  }
  func.func @transform_1(%arg0: i32) -> (i32, i32) {
    %c0_i32 = arith.constant 0 : i32
    %c0_i32_0 = arith.constant 0 : i32
    %c0_i32_1 = arith.constant 0 : i32
    return %c0_i32, %c0_i32_0 : i32, i32
  }
  func.func @transform_2(%arg0: i32) -> (i32, i32) {
    %c0_i32 = arith.constant 0 : i32
    %c0_i32_0 = arith.constant 0 : i32
    %c0_i32_1 = arith.constant 0 : i32
    return %c0_i32, %c0_i32_0 : i32, i32
  }
  func.func @transform_3(%arg0: i32) -> (i32, i32) {
    %c0_i32 = arith.constant 0 : i32
    %c0_i32_0 = arith.constant 0 : i32
    %c0_i32_1 = arith.constant 0 : i32
    return %c0_i32, %c0_i32_0 : i32, i32
  }
  func.func @transform_4(%arg0: i32) -> (i32, i32) {
    %c0_i32 = arith.constant 0 : i32
    %c0_i32_0 = arith.constant 0 : i32
    %c0_i32_1 = arith.constant 0 : i32
    return %c0_i32, %c0_i32_0 : i32, i32
  }
  func.func @transform_5(%arg0: i32) -> (i32, i32) {
    %c0_i32 = arith.constant 0 : i32
    %c0_i32_0 = arith.constant 0 : i32
    return %arg0, %c0_i32 : i32, i32
  }
}

</mosaic_0001>

<llo_original>
// kernel: tpu_custom_call.1
$region0: #{tpu_custom_call.1}
  #allocation0 [shape = 'u32[]', space=smem, size = 0x4, offset = 0x4, fixed_abs, tag = 'smem constant byte address 0x4 - core index']
  #allocation1 [shape = 'u32[72,128]{1,0:T(1,128)}', space=vmem, size = 0x9000, scoped, tag = 'internal scratch']
  %s0 = inlined_call_operand.hbm [shape: bf16[8,32], index: 0, kind: input, shape index: {}]
  %s1 = inlined_call_operand.hbm [shape: bf16[32,32], index: 1, kind: input, shape index: {}]
  %s2 = inlined_call_operand.vmem [shape: f32[1,32], index: 2, kind: input, shape index: {}]
  %s3 = inlined_call_operand.hbm [shape: f32[32,128], index: 3, kind: input, shape index: {}]
  %s4 = inlined_call_operand.vmem [shape: f32[1,128], index: 4, kind: input, shape index: {}]
  %s5 = inlined_call_operand.hbm [shape: f32[8,128], index: 5, kind: output, shape index: {}]
  %s6 = sld [smem:[#allocation0]]
  $region42: #{tpu_custom_call.1} parent=0
    _
  %s8 = ssub.s32 1, %s6
  %s9 = scalar_select 0, %s8, %s6
  $region1: #{tpu_custom_call.1} parent=0
    #allocation2 [shape = 'u8[2048]{0}', space=vmem, size = 0x800, scoped, tag = 'input window, operand 0, single buffered']
    #allocation3 [shape = 's32[1]{0}', space=sflag, size = 0x4, scoped, tag = 'scoped memory for tpu_custom_call.1']
    #allocation4 [shape = 's32[1]{0}', space=sflag, size = 0x4, scoped, tag = 'scoped memory for tpu_custom_call.1']
    #allocation5 [shape = 'u8[8192]{0}', space=vmem, size = 0x2000, scoped, tag = 'input window, operand 1, single buffered']
    #allocation6 [shape = 's32[1]{0}', space=sflag, size = 0x4, scoped, tag = 'scoped memory for tpu_custom_call.1']
    #allocation7 [shape = 'u8[16384]{0}', space=vmem, size = 0x4000, scoped, tag = 'input window, operand 3, single buffered']
    #allocation8 [shape = 'u8[4096]{0}', space=vmem, size = 0x1000, scoped, tag = 'output window, operand 0, single buffered']
    %10 = vsyncpa [#allocation3], 0
    %11 = vsyncpa [#allocation6], 0
    %12 = vsyncpa [#allocation4], 0
    // Predicated region
    $region2: #{tpu_custom_call.1} parent=1 // pred_check
      _
    $region3: #{tpu_custom_call.1} parent=1 // pred_check_branch
      %14 = sbr.rel (0) target = $region5
    $region4: #{tpu_custom_call.1} parent=1 // pred_region
      %16 = vsyncadd [#allocation3], 0
      %s18 = sshll.u32 %s0, 4
      %s19 = int_to_ptr.hbm [resolvable:$true] %s18
      %s20 = sshll.u32 [#allocation2], 4
      %s21 = int_to_ptr.vmem [resolvable:$true] %s20
      %23 = dma.hbm_to_vmem [thread:$0]  %s19, 64, %s21, [#allocation3]
    $region5: #{tpu_custom_call.1} parent=1 // pred_fallthru
      _
    // Predicated region
    $region6: #{tpu_custom_call.1} parent=1 // pred_check
      _
    $region7: #{tpu_custom_call.1} parent=1 // pred_check_branch
      %25 = sbr.rel (0) target = $region9
    $region8: #{tpu_custom_call.1} parent=1 // pred_region
      %27 = vsyncadd [#allocation6], 0
      %s28 = sshll.u32 %s1, 4
      %s29 = int_to_ptr.hbm [resolvable:$true] %s28
      %s30 = sshll.u32 [#allocation5], 4
      %s31 = int_to_ptr.vmem [resolvable:$true] %s30
      %36 = dma.hbm_to_vmem [thread:$0]  %s29, 256, %s31, [#allocation6], 64, 64, 4
    $region9: #{tpu_custom_call.1} parent=1 // pred_fallthru
      _
    // Predicated region
    $region10: #{tpu_custom_call.1} parent=1 // pred_check
      _
    $region11: #{tpu_custom_call.1} parent=1 // pred_check_branch
      %38 = sbr.rel (0) target = $region13
    $region12: #{tpu_custom_call.1} parent=1 // pred_region
      _
    $region13: #{tpu_custom_call.1} parent=1 // pred_fallthru
      _
    // Predicated region
    $region14: #{tpu_custom_call.1} parent=1 // pred_check
      _
    $region15: #{tpu_custom_call.1} parent=1 // pred_check_branch
      %40 = sbr.rel (0) target = $region17
    $region16: #{tpu_custom_call.1} parent=1 // pred_region
      %42 = vsyncadd [#allocation6], 0
      %s43 = sshll.u32 %s3, 4
      %s44 = int_to_ptr.hbm [resolvable:$true] %s43
      %s45 = sshll.u32 [#allocation7], 4
      %s46 = int_to_ptr.vmem [resolvable:$true] %s45
      %51 = dma.hbm_to_vmem [thread:$0]  %s44, 512, %s46, [#allocation6], 128, 128, 8
    $region17: #{tpu_custom_call.1} parent=1 // pred_fallthru
      _
    // Predicated region
    $region18: #{tpu_custom_call.1} parent=1 // pred_check
      _
    $region19: #{tpu_custom_call.1} parent=1 // pred_check_branch
      %53 = sbr.rel (0) target = $region21
    $region20: #{tpu_custom_call.1} parent=1 // pred_region
      _
    $region21: #{tpu_custom_call.1} parent=1 // pred_fallthru
      _
    // Predicated region
    $region22: #{tpu_custom_call.1} parent=1 // pred_check
      _
    $region23: #{tpu_custom_call.1} parent=1 // pred_check_branch
      %55 = sbr.rel (0) target = $region25
    $region24: #{tpu_custom_call.1} parent=1 // pred_region
      %57 = dma.done [#allocation3], 64
    $region25: #{tpu_custom_call.1} parent=1 // pred_fallthru
      _
    // Predicated region
    $region26: #{tpu_custom_call.1} parent=1 // pred_check
      _
    $region27: #{tpu_custom_call.1} parent=1 // pred_check_branch
      %59 = sbr.rel (0) target = $region29
    $region28: #{tpu_custom_call.1} parent=1 // pred_region
      %61 = dma.done [#allocation6], 256
    $region29: #{tpu_custom_call.1} parent=1 // pred_fallthru
      _
    // Predicated region
    $region30: #{tpu_custom_call.1} parent=1 // pred_check
      _
    $region31: #{tpu_custom_call.1} parent=1 // pred_check_branch
      %63 = sbr.rel (0) target = $region33
    $region32: #{tpu_custom_call.1} parent=1 // pred_region
      %65 = dma.done [#allocation6], 512
    $region33: #{tpu_custom_call.1} parent=1 // pred_fallthru
      _
    %v67 = vld [vmem:[#allocation2] sm:$0xf]
    %v68 = vld [vmem:[#allocation5] sm:$0xf]
    %v69 = vld [vmem:[#allocation5 + $0x4] sm:$0xf]
    %v70 = vld [vmem:[#allocation5 + $0x8] sm:$0xf]
    %v71 = vld [vmem:[#allocation5 + $0xc] sm:$0xf]
    %v72 = vld [vmem:[%s2] sm:$0x1]
    %v74 = vperm.slane %v72, 0
    %v80 = vunpack.c.l.b16 %v68
    %v81 = vunpack.c.l.b16 %v69
    %v82 = vunpack.c.l.b16 %v70
    %v83 = vunpack.c.l.b16 %v71
    %v84 = vpack.c.b16 %v81, %v80
    %v85 = vpack.c.b16 %v83, %v82
    %vm88 = vcmask 261120
    %v90 = vsel %vm88, %v67, 0
    %92 = vmatpush.bf16.msra.mxu0 0
    %93 = vmatpush.bf16.msra.mxu0 0
    %94 = vmatpush.bf16.msra.mxu0 0
    %95 = vmatpush.bf16.msra.mxu0 0
    %96 = vmatpush.bf16.msra.mxu0 0
    %97 = vmatpush.bf16.msra.mxu0 0
    %98 = vmatpush.bf16.msra.mxu0 %v85
    %99 = vmatpush.bf16.msra.mxu0 %v84
    %100 = vmatmul.bf16.gmra.mxu0 %v90
    %v101 = vpop.f32.mrf.mxu0
    %v102 = vadd.f32 %v74, %v101
    %v103 = vpop.f32.mrf.mxu0
    %104 = vdwg.mxu0
    %v105 = vtanh.pop %v102
    %v106 = vld [vmem:[#allocation7] sm:$0xff]
    %v107 = vld [vmem:[#allocation7 + $0x8] sm:$0xff]
    %v108 = vld [vmem:[#allocation7 + $0x10] sm:$0xff]
    %v109 = vld [vmem:[#allocation7 + $0x18] sm:$0xff]
    %v110 = vld [vmem:[%s4] sm:$0x1]
    %v112 = vperm.slane %v110, 0
    %v115 = vsel %vm88, %v105, 0
    %117 = vmatpush.msra.mxu0 0.0
    %118 = vmatpush.msra.mxu0 0.0
    %119 = vmatpush.msra.mxu0 0.0
    %120 = vmatpush.msra.mxu0 0.0
    %121 = vmatpush.msra.mxu0 0.0
    %122 = vmatpush.msra.mxu0 0.0
    %123 = vmatpush.msra.mxu0 0.0
    %124 = vmatpush.msra.mxu0 0.0
    %125 = vmatpush.msra.mxu0 0.0
    %126 = vmatpush.msra.mxu0 0.0
    %127 = vmatpush.msra.mxu0 0.0
    %128 = vmatpush.msra.mxu0 0.0
    %129 = vmatpush.msra.mxu0 %v109
    %130 = vmatpush.msra.mxu0 %v108
    %131 = vmatpush.msra.mxu0 %v107
    %132 = vmatpush.msra.mxu0 %v106
    %133 = vmatmul.f32.gmra.mxu0 %v115
    %v134 = vpop.f32.mrf.mxu0
    %v135 = vadd.f32 %v112, %v134
    %136 = vdwg.mxu0
    %137 = vst [vmem:[#allocation8] sm:$0xff] %v135
    // Predicated region
    $region34: #{tpu_custom_call.1} parent=1 // pred_check
      _
    $region35: #{tpu_custom_call.1} parent=1 // pred_check_branch
      %139 = sbr.rel (0) target = $region37
    $region36: #{tpu_custom_call.1} parent=1 // pred_region
      %141 = vsyncadd [#allocation4], 0
      %s143 = sshll.u32 [#allocation8], 4
      %s144 = int_to_ptr.vmem [resolvable:$true] %s143
      %s145 = sshll.u32 %s5, 4
      %s146 = int_to_ptr.hbm [resolvable:$true] %s145
      %148 = dma.vmem_to_hbm [thread:$0]  %s144, 128, %s146, [#allocation4]
    $region37: #{tpu_custom_call.1} parent=1 // pred_fallthru
      _
    // Predicated region
    $region38: #{tpu_custom_call.1} parent=1 // pred_check
      _
    $region39: #{tpu_custom_call.1} parent=1 // pred_check_branch
      %150 = sbr.rel (0) target = $region41
    $region40: #{tpu_custom_call.1} parent=1 // pred_region
      %152 = dma.done [#allocation4], 128
    $region41: #{tpu_custom_call.1} parent=1 // pred_fallthru
      _
    %153 = vsyncpa [#allocation3], 1
    %154 = vsyncpa [#allocation6], 1
    %155 = vsyncpa [#allocation4], 1

</llo_original>
